<compile_context>
chip_gen: v5e
topology: v5e:2x2
jax: 0.10.0
libtpu: 0.0.40
codegen_flags: <defaults>
</compile_context>

<pallas_src>
import math
from typing import NamedTuple

import jax
import jax.numpy as jnp
from jax.experimental import pallas as pl
from jax.experimental.pallas import tpu as pltpu


def _round_up(x, m):
    return ((x + m - 1) // m) * m


class GRUParams(NamedTuple):
    w: jax.Array          # [Ip + Hp, 4*Hp] fused block weight
    b: jax.Array          # [1, 4*Hp]       fused bias row
    input_size: int
    hidden_size: int
    Ip: int
    Hp: int


def prepare_gru_params(weight_ii, weight_hh, bias_ii, bias_hh,
                       compute_dtype=jnp.float32):
    """One-time (hoisted) fusion of the GRU parameters into a single
    lane-dense block weight + bias row.

    weight_ii: [3H, I], weight_hh: [3H, H], bias_ii/hh: [3H]
    Column blocks of the fused weight (each Hp = 128-aligned lanes wide):
        [0:Hp)    -> r   (x and h rows, bias pre-summed)
        [Hp:2Hp)  -> z   (x and h rows, bias pre-summed)
        [2Hp:3Hp) -> n_i (x rows only)
        [3Hp:4Hp) -> n_h (h rows only)
    """
    threeH, I = weight_ii.shape
    H = threeH // 3
    assert weight_hh.shape == (3 * H, H)

    Ip = _round_up(I, 128)
    Hp = _round_up(H, 128)

    wii_t = weight_ii.T.astype(jnp.float32)   # [I, 3H]
    whh_t = weight_hh.T.astype(jnp.float32)   # [H, 3H]

    w = jnp.zeros((Ip + Hp, 4 * Hp), dtype=jnp.float32)
    # x rows
    w = w.at[:I, 0:H].set(wii_t[:, 0:H])                       # r
    w = w.at[:I, Hp:Hp + H].set(wii_t[:, H:2 * H])             # z
    w = w.at[:I, 2 * Hp:2 * Hp + H].set(wii_t[:, 2 * H:3 * H])  # n_i
    # h rows
    w = w.at[Ip:Ip + H, 0:H].set(whh_t[:, 0:H])                       # r
    w = w.at[Ip:Ip + H, Hp:Hp + H].set(whh_t[:, H:2 * H])             # z
    w = w.at[Ip:Ip + H, 3 * Hp:3 * Hp + H].set(whh_t[:, 2 * H:3 * H])  # n_h

    b = jnp.zeros((1, 4 * Hp), dtype=jnp.float32)
    b = b.at[0, 0:H].set((bias_ii[0:H] + bias_hh[0:H]).astype(jnp.float32))
    b = b.at[0, Hp:Hp + H].set(
        (bias_ii[H:2 * H] + bias_hh[H:2 * H]).astype(jnp.float32))
    b = b.at[0, 2 * Hp:2 * Hp + H].set(bias_ii[2 * H:3 * H].astype(jnp.float32))
    b = b.at[0, 3 * Hp:3 * Hp + H].set(bias_hh[2 * H:3 * H].astype(jnp.float32))

    return GRUParams(w=w.astype(compute_dtype), b=b,
                     input_size=I, hidden_size=H, Ip=Ip, Hp=Hp)


def gru_seq_kernel(x_ref, h0_ref, w_ref, b_ref, out_ref, h_scratch):
    """One grid step = one GRU timestep. h carried in VMEM scratch."""
    t = pl.program_id(0)

    @pl.when(t == 0)
    def _():
        h_scratch[...] = h0_ref[...].astype(jnp.float32)

    x = x_ref[0].astype(jnp.float32)          # [B, Ip]
    h = h_scratch[...]                        # [B, Hp] (f32)
    Hp = h.shape[-1]

    # Single fused MXU matmul: [B, Ip+Hp] @ [Ip+Hp, 4*Hp], f32 accumulation.
    lhs = jnp.concatenate([x, h], axis=-1)
    acc = jnp.dot(lhs.astype(w_ref.dtype), w_ref[...],
                  preferred_element_type=jnp.float32) + b_ref[...]

    # Gate blocks are 128-lane aligned -> free vreg selection.
    r = jax.nn.sigmoid(acc[:, 0:Hp])
    z = jax.nn.sigmoid(acc[:, Hp:2 * Hp])
    n = jnp.tanh(acc[:, 2 * Hp:3 * Hp] + r * acc[:, 3 * Hp:4 * Hp])

    h_new = n + z * (h - n)                   # == (1-z)*n + z*h, one op fewer
    h_scratch[...] = h_new
    out_ref[0] = h_new.astype(out_ref.dtype)  # lane-dense [B, Hp] store


def gru_sequence(xs, h0, params: GRUParams):
    """Run the GRU cell over a sequence xs: [T, B, I], h0: [B, H] -> [T, B, H].

    The whole time loop is one pallas_call: weights stay VMEM-resident,
    the hidden state is carried in a VMEM scratch accumulator.
    """
    T, B, I = xs.shape
    H, Ip, Hp = params.hidden_size, params.Ip, params.Hp
    assert I == params.input_size and h0.shape == (B, H)

    xs_p = jnp.pad(xs, ((0, 0), (0, 0), (0, Ip - I))) if Ip != I else xs
    h0_p = jnp.pad(h0, ((0, 0), (0, Hp - H))) if Hp != H else h0

    out = pl.pallas_call(
        gru_seq_kernel,
        out_shape=jax.ShapeDtypeStruct((T, B, Hp), h0.dtype),
        grid_spec=pltpu.PrefetchScalarGridSpec(
            num_scalar_prefetch=0,
            grid=(T,),
            in_specs=[
                pl.BlockSpec((1, B, Ip), lambda t: (t, 0, 0)),        # x_t
                pl.BlockSpec((B, Hp), lambda t: (0, 0)),              # h0
                pl.BlockSpec((Ip + Hp, 4 * Hp), lambda t: (0, 0)),    # fused W
                pl.BlockSpec((1, 4 * Hp), lambda t: (0, 0)),          # fused b
            ],
            out_specs=pl.BlockSpec((1, B, Hp), lambda t: (t, 0, 0)),
            scratch_shapes=[pltpu.VMEM((B, Hp), jnp.float32)],        # carried h
        ),
        compiler_params=pltpu.CompilerParams(
            dimension_semantics=("arbitrary",)),  # sequential carry over time
    )(xs_p, h0_p, params.w, params.b)

    return out[:, :, :H]


def gru_cell_fixed(x, h, params: GRUParams):
    """Single-step GRUCellFixed forward (eval mode): x [B, I], h [B, H]."""
    return gru_sequence(x[None], h, params)[0]


def gru_cell_ref(x, h, weight_ii, weight_hh, bias_ii, bias_hh):
    """Plain-JAX reference mirroring the PyTorch forward."""
    a = x @ weight_ii.T + bias_ii
    b = h @ weight_hh.T + bias_hh
    H = h.shape[-1]
    r = jax.nn.sigmoid(a[:, :H] + b[:, :H])
    z = jax.nn.sigmoid(a[:, H:2 * H] + b[:, H:2 * H])
    n = jnp.tanh(a[:, 2 * H:] + r * b[:, 2 * H:])
    return (1.0 - z) * n + z * h


if __name__ == "__main__":
    key = jax.random.PRNGKey(0)
    keys = jax.random.split(key, 7)

    batch = 8
    input_size = 16
    hidden_size = 32
    seq_len = 8
    scale = math.sqrt(1.0 / hidden_size)

    x = jax.random.normal(keys[0], (batch, input_size), dtype=jnp.float32)
    h = jax.random.normal(keys[1], (batch, hidden_size), dtype=jnp.float32)
    weight_ii = scale * jax.random.normal(
        keys[2], (3 * hidden_size, input_size), dtype=jnp.float32)
    weight_hh = scale * jax.random.normal(
        keys[3], (3 * hidden_size, hidden_size), dtype=jnp.float32)
    bias_ii = scale * jax.random.normal(keys[4], (3 * hidden_size,), dtype=jnp.float32)
    bias_hh = scale * jax.random.normal(keys[5], (3 * hidden_size,), dtype=jnp.float32)
    xs = jax.random.normal(keys[6], (seq_len, batch, input_size), dtype=jnp.float32)

    # One-time parameter fusion (hoisted out of the per-call path).
    params = prepare_gru_params(weight_ii, weight_hh, bias_ii, bias_hh)

    # --- single-step forward (matches the PyTorch module semantics) ---
    out = jax.block_until_ready(gru_cell_fixed(x, h, params))
    ref = gru_cell_ref(x, h, weight_ii, weight_hh, bias_ii, bias_hh)
    assert out.shape == (batch, hidden_size)
    assert jnp.allclose(out, ref, atol=1e-5, rtol=1e-5)

    # --- full sequence in ONE pallas_call (time loop inside the kernel) ---
    seq_out = jax.block_until_ready(gru_sequence(xs, h, params))
    h_ref = h
    refs = []
    for t in range(seq_len):
        h_ref = gru_cell_ref(xs[t], h_ref, weight_ii, weight_hh, bias_ii, bias_hh)
        refs.append(h_ref)
    seq_ref = jnp.stack(refs)
    assert seq_out.shape == (seq_len, batch, hidden_size)
    assert jnp.allclose(seq_out, seq_ref, atol=1e-4, rtol=1e-4)

    print("KERNEL_OK")
</pallas_src>

<mosaic_0001>
module attributes {stable_mosaic.version = 11 : i64} {
  func.func @gru_seq_kernel(%arg0: i32, %arg1: memref<1x8x128xf32, #tpu.memory_space<vmem>>, %arg2: memref<8x128xf32, #tpu.memory_space<vmem>>, %arg3: memref<256x512xf32, #tpu.memory_space<vmem>>, %arg4: memref<1x512xf32, #tpu.memory_space<vmem>>, %arg5: memref<1x8x128xf32, #tpu.memory_space<vmem>>, %arg6: memref<8x128xf32, #tpu.memory_space<vmem>>) attributes {dimension_semantics = [#tpu.dimension_semantics<arbitrary>], iteration_bounds = array<i64: 1>, scalar_prefetch = 0 : i64, scratch_operands = 1 : i64, tpu.core_type = #tpu.core_type<tc>, window_params = [{transform_indices = @transform_0, window_bounds = array<i64: 1, 8, 128>}, {pipeline_mode = #tpu.pipeline_mode<synchronous>, transform_indices = @transform_1, window_bounds = array<i64: 8, 128>}, {pipeline_mode = #tpu.pipeline_mode<synchronous>, transform_indices = @transform_2, window_bounds = array<i64: 256, 512>}, {pipeline_mode = #tpu.pipeline_mode<synchronous>, transform_indices = @transform_3, window_bounds = array<i64: 1, 512>}, {transform_indices = @transform_4, window_bounds = array<i64: 1, 8, 128>}]} {
    %c0_i32 = arith.constant 0 : i32
    %0 = arith.cmpi eq, %arg0, %c0_i32 : i32
    %1 = arith.extui %0 : i1 to i32
    %c0_i32_0 = arith.constant 0 : i32
    %2 = arith.cmpi ne, %1, %c0_i32_0 : i32
    scf.if %2 {
      %c0_16 = arith.constant 0 : index
      %c0_17 = arith.constant 0 : index
      %36 = vector.load %arg2[%c0_16, %c0_17] : memref<8x128xf32, #tpu.memory_space<vmem>>, vector<8x128xf32>
      %c0_18 = arith.constant 0 : index
      %c0_19 = arith.constant 0 : index
      %37 = vector.load %arg6[%c0_18, %c0_19] : memref<8x128xf32, #tpu.memory_space<vmem>>, vector<8x128xf32>
      tpu.vector_store %arg6[%c0_18, %c0_19], %36 {strides = array<i32>} : memref<8x128xf32, #tpu.memory_space<vmem>>, vector<8x128xf32>,
    } else {
    }
    %c0 = arith.constant 0 : index
    %c0_1 = arith.constant 0 : index
    %c0_2 = arith.constant 0 : index
    %3 = vector.load %arg1[%c0, %c0_1, %c0_2] : memref<1x8x128xf32, #tpu.memory_space<vmem>>, vector<1x8x128xf32>
    %4 = vector.shape_cast %3 : vector<1x8x128xf32> to vector<8x128xf32>
    %c0_3 = arith.constant 0 : index
    %c0_4 = arith.constant 0 : index
    %5 = vector.load %arg6[%c0_3, %c0_4] : memref<8x128xf32, #tpu.memory_space<vmem>>, vector<8x128xf32>
    %6 = tpu.concatenate %4, %5 in 1 : vector<8x128xf32>, vector<8x128xf32> -> vector<8x256xf32>
    %c0_5 = arith.constant 0 : index
    %c0_6 = arith.constant 0 : index
    %7 = vector.load %arg3[%c0_5, %c0_6] : memref<256x512xf32, #tpu.memory_space<vmem>>, vector<256x512xf32>
    %cst = arith.constant dense<0.000000e+00> : vector<8x512xf32>
    %8 = tpu.matmul %6, %7, %cst {dimension_numbers = #tpu.dot_dimension_numbers<[1], [0], [0], [1], [0, 0, 1, 1], [], []>} : vector<8x256xf32>, vector<256x512xf32>, vector<8x512xf32> -> vector<8x512xf32>
    %c0_7 = arith.constant 0 : index
    %c0_8 = arith.constant 0 : index
    %9 = vector.load %arg4[%c0_7, %c0_8] : memref<1x512xf32, #tpu.memory_space<vmem>>, vector<1x512xf32>
    %10 = vector.broadcast %9 : vector<1x512xf32> to vector<8x512xf32>
    %11 = arith.addf %8, %10 : vector<8x512xf32>
    %12 = vector.extract_strided_slice %11 {offsets = [0, 0], sizes = [8, 128], strides = [1, 1]} : vector<8x512xf32> to vector<8x128xf32>
    %13 = arith.negf %12 : vector<8x128xf32>
    %14 = math.exp %13 : vector<8x128xf32>
    %cst_9 = arith.constant 1.000000e+00 : f32
    %15 = vector.broadcast %cst_9 : f32 to vector<8x128xf32>
    %16 = arith.addf %15, %14 : vector<8x128xf32>
    %17 = arith.divf %15, %16 : vector<8x128xf32>
    %18 = vector.extract_strided_slice %11 {offsets = [0, 128], sizes = [8, 128], strides = [1, 1]} : vector<8x512xf32> to vector<8x128xf32>
    %19 = arith.negf %18 : vector<8x128xf32>
    %20 = math.exp %19 : vector<8x128xf32>
    %cst_10 = arith.constant 1.000000e+00 : f32
    %21 = vector.broadcast %cst_10 : f32 to vector<8x128xf32>
    %22 = arith.addf %21, %20 : vector<8x128xf32>
    %23 = arith.divf %21, %22 : vector<8x128xf32>
    %24 = vector.extract_strided_slice %11 {offsets = [0, 256], sizes = [8, 128], strides = [1, 1]} : vector<8x512xf32> to vector<8x128xf32>
    %25 = vector.extract_strided_slice %11 {offsets = [0, 384], sizes = [8, 128], strides = [1, 1]} : vector<8x512xf32> to vector<8x128xf32>
    %26 = arith.mulf %17, %25 : vector<8x128xf32>
    %27 = arith.addf %24, %26 : vector<8x128xf32>
    %28 = math.tanh %27 : vector<8x128xf32>
    %29 = arith.subf %5, %28 : vector<8x128xf32>
    %30 = arith.mulf %23, %29 : vector<8x128xf32>
    %31 = arith.addf %28, %30 : vector<8x128xf32>
    %c0_11 = arith.constant 0 : index
    %c0_12 = arith.constant 0 : index
    %32 = vector.load %arg6[%c0_11, %c0_12] : memref<8x128xf32, #tpu.memory_space<vmem>>, vector<8x128xf32>
    tpu.vector_store %arg6[%c0_11, %c0_12], %31 {strides = array<i32>} : memref<8x128xf32, #tpu.memory_space<vmem>>, vector<8x128xf32>,
    %c0_13 = arith.constant 0 : index
    %c0_14 = arith.constant 0 : index
    %c0_15 = arith.constant 0 : index
    %33 = vector.load %arg5[%c0_13, %c0_14, %c0_15] : memref<1x8x128xf32, #tpu.memory_space<vmem>>, vector<1x8x128xf32>
    %34 = vector.shape_cast %33 : vector<1x8x128xf32> to vector<8x128xf32>
    %35 = vector.shape_cast %31 : vector<8x128xf32> to vector<1x8x128xf32>
    tpu.vector_store %arg5[%c0_13, %c0_14, %c0_15], %35 {strides = array<i32>} : memref<1x8x128xf32, #tpu.memory_space<vmem>>, vector<1x8x128xf32>,
    return
  }
  func.func @transform_0(%arg0: i32) -> (i32, i32, i32) {
    %c0_i32 = arith.constant 0 : i32
    %c0_i32_0 = arith.constant 0 : i32
    %c0_i32_1 = arith.constant 0 : i32
    return %arg0, %c0_i32, %c0_i32_0 : i32, i32, i32
  }
  func.func @transform_1(%arg0: i32) -> (i32, i32) {
    %c0_i32 = arith.constant 0 : i32
    %c0_i32_0 = arith.constant 0 : i32
    %c0_i32_1 = arith.constant 0 : i32
    return %c0_i32, %c0_i32_0 : i32, i32
  }
  func.func @transform_2(%arg0: i32) -> (i32, i32) {
    %c0_i32 = arith.constant 0 : i32
    %c0_i32_0 = arith.constant 0 : i32
    %c0_i32_1 = arith.constant 0 : i32
    return %c0_i32, %c0_i32_0 : i32, i32
  }
  func.func @transform_3(%arg0: i32) -> (i32, i32) {
    %c0_i32 = arith.constant 0 : i32
    %c0_i32_0 = arith.constant 0 : i32
    %c0_i32_1 = arith.constant 0 : i32
    return %c0_i32, %c0_i32_0 : i32, i32
  }
  func.func @transform_4(%arg0: i32) -> (i32, i32, i32) {
    %c0_i32 = arith.constant 0 : i32
    %c0_i32_0 = arith.constant 0 : i32
    %c0_i32_1 = arith.constant 0 : i32
    return %arg0, %c0_i32, %c0_i32_0 : i32, i32, i32
  }
}

</mosaic_0001>

<llo_original>
// kernel: tpu_custom_call.1
$region0: #{tpu_custom_call.1}
  #allocation0 [shape = 'u32[]', space=smem, size = 0x4, offset = 0x4, fixed_abs, tag = 'smem constant byte address 0x4 - core index']
  #allocation1 [shape = 'u32[72,128]{1,0:T(1,128)}', space=vmem, size = 0x9000, scoped, tag = 'internal scratch']
  #allocation2 [shape = 'f32[8,128]{1,0:T(8,128)}', space=vmem, size = 0x1000, scoped, tag = 'scratch operand']
  %s0 = inlined_call_operand.hbm [shape: f32[1,8,128], index: 0, kind: input, shape index: {}]
  %s1 = inlined_call_operand.hbm [shape: f32[8,128], index: 1, kind: input, shape index: {}]
  %s2 = inlined_call_operand.hbm [shape: f32[256,512], index: 2, kind: input, shape index: {}]
  %s3 = inlined_call_operand.hbm [shape: f32[1,512], index: 3, kind: input, shape index: {}]
  %s4 = inlined_call_operand.hbm [shape: f32[1,8,128], index: 4, kind: output, shape index: {}]
  %s5 = sld [smem:[#allocation0]]
  $region46: #{tpu_custom_call.1} parent=0
    _
  %s7 = ssub.s32 1, %s5
  %s8 = scalar_select 0, %s7, %s5
  $region1: #{tpu_custom_call.1} parent=0
    #allocation3 [shape = 'u8[4096]{0}', space=vmem, size = 0x1000, scoped, tag = 'input window, operand 0, single buffered']
    #allocation4 [shape = 's32[1]{0}', space=sflag, size = 0x4, scoped, tag = 'scoped memory for tpu_custom_call.1']
    #allocation5 [shape = 's32[1]{0}', space=sflag, size = 0x4, scoped, tag = 'scoped memory for tpu_custom_call.1']
    #allocation6 [shape = 'u8[4096]{0}', space=vmem, size = 0x1000, scoped, tag = 'input window, operand 1, single buffered']
    #allocation7 [shape = 's32[1]{0}', space=sflag, size = 0x4, scoped, tag = 'scoped memory for tpu_custom_call.1']
    #allocation8 [shape = 'u8[524288]{0}', space=vmem, size = 0x80000, scoped, tag = 'input window, operand 2, single buffered']
    #allocation9 [shape = 'u8[2048]{0}', space=vmem, size = 0x800, scoped, tag = 'input window, operand 3, single buffered']
    #allocation10 [shape = 's32[1]{0}', space=sflag, size = 0x4, scoped, tag = 'scoped memory for tpu_custom_call.1']
    #allocation11 [shape = 'u8[4096]{0}', space=vmem, size = 0x1000, scoped, tag = 'output window, operand 0, single buffered']
    %9 = vsyncpa [#allocation4], 0
    %10 = vsyncpa [#allocation7], 0
    %11 = vsyncpa [#allocation10], 0
    %12 = vsyncpa [#allocation5], 0
    // Predicated region
    $region2: #{tpu_custom_call.1} parent=1 // pred_check
      _
    $region3: #{tpu_custom_call.1} parent=1 // pred_check_branch
      %14 = sbr.rel (0) target = $region5
    $region4: #{tpu_custom_call.1} parent=1 // pred_region
      %16 = vsyncadd [#allocation4], 0
      %s18 = sshll.u32 %s0, 4
      %s19 = int_to_ptr.hbm [resolvable:$true] %s18
      %s20 = sshll.u32 [#allocation3], 4
      %s21 = int_to_ptr.vmem [resolvable:$true] %s20
      %23 = dma.hbm_to_vmem [thread:$0]  %s19, 128, %s21, [#allocation4]
    $region5: #{tpu_custom_call.1} parent=1 // pred_fallthru
      _
    // Predicated region
    $region6: #{tpu_custom_call.1} parent=1 // pred_check
      _
    $region7: #{tpu_custom_call.1} parent=1 // pred_check_branch
      %25 = sbr.rel (0) target = $region9
    $region8: #{tpu_custom_call.1} parent=1 // pred_region
      %27 = vsyncadd [#allocation7], 0
      %s29 = sshll.u32 %s1, 4
      %s30 = int_to_ptr.hbm [resolvable:$true] %s29
      %s31 = sshll.u32 [#allocation6], 4
      %s32 = int_to_ptr.vmem [resolvable:$true] %s31
      %34 = dma.hbm_to_vmem [thread:$0]  %s30, 128, %s32, [#allocation7]
    $region9: #{tpu_custom_call.1} parent=1 // pred_fallthru
      _
    // Predicated region
    $region10: #{tpu_custom_call.1} parent=1 // pred_check
      _
    $region11: #{tpu_custom_call.1} parent=1 // pred_check_branch
      %36 = sbr.rel (0) target = $region13
    $region12: #{tpu_custom_call.1} parent=1 // pred_region
      %38 = vsyncadd [#allocation7], 0
      %s39 = sshll.u32 %s2, 4
      %s40 = int_to_ptr.hbm [resolvable:$true] %s39
      %s41 = sshll.u32 [#allocation8], 4
      %s42 = int_to_ptr.vmem [resolvable:$true] %s41
      %47 = dma.hbm_to_vmem [thread:$0]  %s40, 16384, %s42, [#allocation7], 512, 512, 32
    $region13: #{tpu_custom_call.1} parent=1 // pred_fallthru
      _
    // Predicated region
    $region14: #{tpu_custom_call.1} parent=1 // pred_check
      _
    $region15: #{tpu_custom_call.1} parent=1 // pred_check_branch
      %49 = sbr.rel (0) target = $region17
    $region16: #{tpu_custom_call.1} parent=1 // pred_region
      %51 = vsyncadd [#allocation10], 0
      %s53 = sshll.u32 %s3, 4
      %s54 = int_to_ptr.hbm [resolvable:$true] %s53
      %s55 = sshll.u32 [#allocation9], 4
      %s56 = int_to_ptr.vmem [resolvable:$true] %s55
      %58 = dma.hbm_to_vmem [thread:$0]  %s54, 64, %s56, [#allocation10]
    $region17: #{tpu_custom_call.1} parent=1 // pred_fallthru
      _
    // Predicated region
    $region18: #{tpu_custom_call.1} parent=1 // pred_check
      _
    $region19: #{tpu_custom_call.1} parent=1 // pred_check_branch
      %60 = sbr.rel (0) target = $region21
    $region20: #{tpu_custom_call.1} parent=1 // pred_region
      %62 = dma.done [#allocation4], 128
    $region21: #{tpu_custom_call.1} parent=1 // pred_fallthru
      _
    // Predicated region
    $region22: #{tpu_custom_call.1} parent=1 // pred_check
      _
    $region23: #{tpu_custom_call.1} parent=1 // pred_check_branch
      %64 = sbr.rel (0) target = $region25
    $region24: #{tpu_custom_call.1} parent=1 // pred_region
      %66 = dma.done [#allocation7], 128
    $region25: #{tpu_custom_call.1} parent=1 // pred_fallthru
      _
    // Predicated region
    $region26: #{tpu_custom_call.1} parent=1 // pred_check
      _
    $region27: #{tpu_custom_call.1} parent=1 // pred_check_branch
      %68 = sbr.rel (0) target = $region29
    $region28: #{tpu_custom_call.1} parent=1 // pred_region
      %70 = dma.done [#allocation7], 16384
    $region29: #{tpu_custom_call.1} parent=1 // pred_fallthru
      _
    // Predicated region
    $region30: #{tpu_custom_call.1} parent=1 // pred_check
      _
    $region31: #{tpu_custom_call.1} parent=1 // pred_check_branch
      %72 = sbr.rel (0) target = $region33
    $region32: #{tpu_custom_call.1} parent=1 // pred_region
      %74 = dma.done [#allocation10], 64
    $region33: #{tpu_custom_call.1} parent=1 // pred_fallthru
      _
    %p75 = scmp.eq.s32.totalorder 0, 0
    // Predicated region
    $region34: #{tpu_custom_call.1} parent=1 // pred_check
      %p76 = pneg %p75
    $region35: #{tpu_custom_call.1} parent=1 // pred_check_branch
      %78 = sbr.rel (%p76) target = $region37
    $region36: #{tpu_custom_call.1} parent=1 // pred_region
      %v79 = vld [vmem:[#allocation6] sm:$0xff]
      %80 = vst [vmem:[#allocation2] sm:$0xff] %v79
    $region37: #{tpu_custom_call.1} parent=1 // pred_fallthru
      _
    %v81 = vld [vmem:[#allocation3] sm:$0xff]
    %v82 = vld [vmem:[#allocation2] sm:$0xff]
    %v83 = vld [vmem:[#allocation8] sm:$0xff]
    %v84 = vld [vmem:[#allocation8 + $0x8] sm:$0xff]
    %v85 = vld [vmem:[#allocation8 + $0x10] sm:$0xff]
    %v86 = vld [vmem:[#allocation8 + $0x18] sm:$0xff]
    %v87 = vld [vmem:[#allocation8 + $0x20] sm:$0xff]
    %v88 = vld [vmem:[#allocation8 + $0x28] sm:$0xff]
    %v89 = vld [vmem:[#allocation8 + $0x30] sm:$0xff]
    %v90 = vld [vmem:[#allocation8 + $0x38] sm:$0xff]
    %v91 = vld [vmem:[#allocation8 + $0x40] sm:$0xff]
    %v92 = vld [vmem:[#allocation8 + $0x48] sm:$0xff]
    %v93 = vld [vmem:[#allocation8 + $0x50] sm:$0xff]
    %v94 = vld [vmem:[#allocation8 + $0x58] sm:$0xff]
    %v95 = vld [vmem:[#allocation8 + $0x60] sm:$0xff]
    %v96 = vld [vmem:[#allocation8 + $0x68] sm:$0xff]
    %v97 = vld [vmem:[#allocation8 + $0x70] sm:$0xff]
    %v98 = vld [vmem:[#allocation8 + $0x78] sm:$0xff]
    %v99 = vld [vmem:[#allocation8 + $0x80] sm:$0xff]
    %v100 = vld [vmem:[#allocation8 + $0x88] sm:$0xff]
    %v101 = vld [vmem:[#allocation8 + $0x90] sm:$0xff]
    %v102 = vld [vmem:[#allocation8 + $0x98] sm:$0xff]
    %v103 = vld [vmem:[#allocation8 + $0xa0] sm:$0xff]
    %v104 = vld [vmem:[#allocation8 + $0xa8] sm:$0xff]
    %v105 = vld [vmem:[#allocation8 + $0xb0] sm:$0xff]
    %v106 = vld [vmem:[#allocation8 + $0xb8] sm:$0xff]
    %v107 = vld [vmem:[#allocation8 + $0xc0] sm:$0xff]
    %v108 = vld [vmem:[#allocation8 + $0xc8] sm:$0xff]
    %v109 = vld [vmem:[#allocation8 + $0xd0] sm:$0xff]
    %v110 = vld [vmem:[#allocation8 + $0xd8] sm:$0xff]
    %v111 = vld [vmem:[#allocation8 + $0xe0] sm:$0xff]
    %v112 = vld [vmem:[#allocation8 + $0xe8] sm:$0xff]
    %v113 = vld [vmem:[#allocation8 + $0xf0] sm:$0xff]
    %v114 = vld [vmem:[#allocation8 + $0xf8] sm:$0xff]
    %v115 = vld [vmem:[#allocation8 + $0x100] sm:$0xff]
    %v116 = vld [vmem:[#allocation8 + $0x108] sm:$0xff]
    %v117 = vld [vmem:[#allocation8 + $0x110] sm:$0xff]
    %v118 = vld [vmem:[#allocation8 + $0x118] sm:$0xff]
    %v119 = vld [vmem:[#allocation8 + $0x120] sm:$0xff]
    %v120 = vld [vmem:[#allocation8 + $0x128] sm:$0xff]
    %v121 = vld [vmem:[#allocation8 + $0x130] sm:$0xff]
    %v122 = vld [vmem:[#allocation8 + $0x138] sm:$0xff]
    %v123 = vld [vmem:[#allocation8 + $0x140] sm:$0xff]
    %v124 = vld [vmem:[#allocation8 + $0x148] sm:$0xff]
    %v125 = vld [vmem:[#allocation8 + $0x150] sm:$0xff]
    %v126 = vld [vmem:[#allocation8 + $0x158] sm:$0xff]
    %v127 = vld [vmem:[#allocation8 + $0x160] sm:$0xff]
    %v128 = vld [vmem:[#allocation8 + $0x168] sm:$0xff]
    %v129 = vld [vmem:[#allocation8 + $0x170] sm:$0xff]
    %v130 = vld [vmem:[#allocation8 + $0x178] sm:$0xff]
    %v131 = vld [vmem:[#allocation8 + $0x180] sm:$0xff]
    %v132 = vld [vmem:[#allocation8 + $0x188] sm:$0xff]
    %v133 = vld [vmem:[#allocation8 + $0x190] sm:$0xff]
    %v134 = vld [vmem:[#allocation8 + $0x198] sm:$0xff]
    %v135 = vld [vmem:[#allocation8 + $0x1a0] sm:$0xff]
    %v136 = vld [vmem:[#allocation8 + $0x1a8] sm:$0xff]
    %v137 = vld [vmem:[#allocation8 + $0x1b0] sm:$0xff]
    %v138 = vld [vmem:[#allocation8 + $0x1b8] sm:$0xff]
    %v139 = vld [vmem:[#allocation8 + $0x1c0] sm:$0xff]
    %v140 = vld [vmem:[#allocation8 + $0x1c8] sm:$0xff]
    %v141 = vld [vmem:[#allocation8 + $0x1d0] sm:$0xff]
    %v142 = vld [vmem:[#allocation8 + $0x1d8] sm:$0xff]
    %v143 = vld [vmem:[#allocation8 + $0x1e0] sm:$0xff]
    %v144 = vld [vmem:[#allocation8 + $0x1e8] sm:$0xff]
    %v145 = vld [vmem:[#allocation8 + $0x1f0] sm:$0xff]
    %v146 = vld [vmem:[#allocation8 + $0x1f8] sm:$0xff]
    %v147 = vld [vmem:[#allocation8 + $0x200] sm:$0xff]
    %v148 = vld [vmem:[#allocation8 + $0x208] sm:$0xff]
    %v149 = vld [vmem:[#allocation8 + $0x210] sm:$0xff]
    %v150 = vld [vmem:[#allocation8 + $0x218] sm:$0xff]
    %v151 = vld [vmem:[#allocation8 + $0x220] sm:$0xff]
    %v152 = vld [vmem:[#allocation8 + $0x228] sm:$0xff]
    %v153 = vld [vmem:[#allocation8 + $0x230] sm:$0xff]
    %v154 = vld [vmem:[#allocation8 + $0x238] sm:$0xff]
    %v155 = vld [vmem:[#allocation8 + $0x240] sm:$0xff]
    %v156 = vld [vmem:[#allocation8 + $0x248] sm:$0xff]
    %v157 = vld [vmem:[#allocation8 + $0x250] sm:$0xff]
    %v158 = vld [vmem:[#allocation8 + $0x258] sm:$0xff]
    %v159 = vld [vmem:[#allocation8 + $0x260] sm:$0xff]
    %v160 = vld [vmem:[#allocation8 + $0x268] sm:$0xff]
    %v161 = vld [vmem:[#allocation8 + $0x270] sm:$0xff]
    %v162 = vld [vmem:[#allocation8 + $0x278] sm:$0xff]
    %v163 = vld [vmem:[#allocation8 + $0x280] sm:$0xff]
    %v164 = vld [vmem:[#allocation8 + $0x288] sm:$0xff]
    %v165 = vld [vmem:[#allocation8 + $0x290] sm:$0xff]
    %v166 = vld [vmem:[#allocation8 + $0x298] sm:$0xff]
    %v167 = vld [vmem:[#allocation8 + $0x2a0] sm:$0xff]
    %v168 = vld [vmem:[#allocation8 + $0x2a8] sm:$0xff]
    %v169 = vld [vmem:[#allocation8 + $0x2b0] sm:$0xff]
    %v170 = vld [vmem:[#allocation8 + $0x2b8] sm:$0xff]
    %v171 = vld [vmem:[#allocation8 + $0x2c0] sm:$0xff]
    %v172 = vld [vmem:[#allocation8 + $0x2c8] sm:$0xff]
    %v173 = vld [vmem:[#allocation8 + $0x2d0] sm:$0xff]
    %v174 = vld [vmem:[#allocation8 + $0x2d8] sm:$0xff]
    %v175 = vld [vmem:[#allocation8 + $0x2e0] sm:$0xff]
    %v176 = vld [vmem:[#allocation8 + $0x2e8] sm:$0xff]
    %v177 = vld [vmem:[#allocation8 + $0x2f0] sm:$0xff]
    %v178 = vld [vmem:[#allocation8 + $0x2f8] sm:$0xff]
    %v179 = vld [vmem:[#allocation8 + $0x300] sm:$0xff]
    %v180 = vld [vmem:[#allocation8 + $0x308] sm:$0xff]
    %v181 = vld [vmem:[#allocation8 + $0x310] sm:$0xff]
    %v182 = vld [vmem:[#allocation8 + $0x318] sm:$0xff]
    %v183 = vld [vmem:[#allocation8 + $0x320] sm:$0xff]
    %v184 = vld [vmem:[#allocation8 + $0x328] sm:$0xff]
    %v185 = vld [vmem:[#allocation8 + $0x330] sm:$0xff]
    %v186 = vld [vmem:[#allocation8 + $0x338] sm:$0xff]
    %v187 = vld [vmem:[#allocation8 + $0x340] sm:$0xff]
    %v188 = vld [vmem:[#allocation8 + $0x348] sm:$0xff]
    %v189 = vld [vmem:[#allocation8 + $0x350] sm:$0xff]
    %v190 = vld [vmem:[#allocation8 + $0x358] sm:$0xff]
    %v191 = vld [vmem:[#allocation8 + $0x360] sm:$0xff]
    %v192 = vld [vmem:[#allocation8 + $0x368] sm:$0xff]
    %v193 = vld [vmem:[#allocation8 + $0x370] sm:$0xff]
    %v194 = vld [vmem:[#allocation8 + $0x378] sm:$0xff]
    %v195 = vld [vmem:[#allocation8 + $0x380] sm:$0xff]
    %v196 = vld [vmem:[#allocation8 + $0x388] sm:$0xff]
    %v197 = vld [vmem:[#allocation8 + $0x390] sm:$0xff]
    %v198 = vld [vmem:[#allocation8 + $0x398] sm:$0xff]
    %v199 = vld [vmem:[#allocation8 + $0x3a0] sm:$0xff]
    %v200 = vld [vmem:[#allocation8 + $0x3a8] sm:$0xff]
    %v201 = vld [vmem:[#allocation8 + $0x3b0] sm:$0xff]
    %v202 = vld [vmem:[#allocation8 + $0x3b8] sm:$0xff]
    %v203 = vld [vmem:[#allocation8 + $0x3c0] sm:$0xff]
    %v204 = vld [vmem:[#allocation8 + $0x3c8] sm:$0xff]
    %v205 = vld [vmem:[#allocation8 + $0x3d0] sm:$0xff]
    %v206 = vld [vmem:[#allocation8 + $0x3d8] sm:$0xff]
    %v207 = vld [vmem:[#allocation8 + $0x3e0] sm:$0xff]
    %v208 = vld [vmem:[#allocation8 + $0x3e8] sm:$0xff]
    %v209 = vld [vmem:[#allocation8 + $0x3f0] sm:$0xff]
    %v210 = vld [vmem:[#allocation8 + $0x3f8] sm:$0xff]
    %v211 = vld [vmem:[#allocation9] sm:$0xf]
    %v213 = vperm.slane %v211, 0
    %v214 = vperm.slane %v211, 1
    %v215 = vperm.slane %v211, 2
    %v216 = vperm.slane %v211, 3
    %221 = vmatpush.msra.mxu0 %v143
    %222 = vmatpush.msra.mxu0 %v139
    %223 = vmatpush.msra.mxu0 %v135
    %224 = vmatpush.msra.mxu0 %v131
    %225 = vmatpush.msra.mxu0 %v127
    %226 = vmatpush.msra.mxu0 %v123
    %227 = vmatpush.msra.mxu0 %v119
    %228 = vmatpush.msra.mxu0 %v115
    %229 = vmatpush.msra.mxu0 %v111
    %230 = vmatpush.msra.mxu0 %v107
    %231 = vmatpush.msra.mxu0 %v103
    %232 = vmatpush.msra.mxu0 %v99
    %233 = vmatpush.msra.mxu0 %v95
    %234 = vmatpush.msra.mxu0 %v91
    %235 = vmatpush.msra.mxu0 %v87
    %236 = vmatpush.msra.mxu0 %v83
    %237 = vmatmul.f32.gmra.mxu0 %v81
    %v238 = vpop.f32.mrf.mxu0
    %v239 = vadd.f32 %v213, %v238
    %240 = vdwg.mxu0
    %241 = vmatpush.msra.mxu0 %v207
    %242 = vmatpush.msra.mxu0 %v203
    %243 = vmatpush.msra.mxu0 %v199
    %244 = vmatpush.msra.mxu0 %v195
    %245 = vmatpush.msra.mxu0 %v191
    %246 = vmatpush.msra.mxu0 %v187
    %247 = vmatpush.msra.mxu0 %v183
    %248 = vmatpush.msra.mxu0 %v179
    %249 = vmatpush.msra.mxu0 %v175
    %250 = vmatpush.msra.mxu0 %v171
    %251 = vmatpush.msra.mxu0 %v167
    %252 = vmatpush.msra.mxu0 %v163
    %253 = vmatpush.msra.mxu0 %v159
    %254 = vmatpush.msra.mxu0 %v155
    %255 = vmatpush.msra.mxu0 %v151
    %256 = vmatpush.msra.mxu0 %v147
    %257 = vmatmul.f32.gmra.mxu0 %v82
    %v258 = vpop.f32.mrf.mxu0
    %v259 = vadd.f32 %v239, %v258
    %260 = vdwg.mxu0
    %261 = vmatpush.msra.mxu0 %v144
    %262 = vmatpush.msra.mxu0 %v140
    %263 = vmatpush.msra.mxu0 %v136
    %264 = vmatpush.msra.mxu0 %v132
    %265 = vmatpush.msra.mxu0 %v128
    %266 = vmatpush.msra.mxu0 %v124
    %267 = vmatpush.msra.mxu0 %v120
    %268 = vmatpush.msra.mxu0 %v116
    %269 = vmatpush.msra.mxu0 %v112
    %270 = vmatpush.msra.mxu0 %v108
    %271 = vmatpush.msra.mxu0 %v104
    %272 = vmatpush.msra.mxu0 %v100
    %273 = vmatpush.msra.mxu0 %v96
    %274 = vmatpush.msra.mxu0 %v92
    %275 = vmatpush.msra.mxu0 %v88
    %276 = vmatpush.msra.mxu0 %v84
    %277 = vmatmul.f32.gmra.mxu0 %v81
    %v278 = vpop.f32.mrf.mxu0
    %v279 = vadd.f32 %v214, %v278
    %280 = vdwg.mxu0
    %281 = vmatpush.msra.mxu0 %v208
    %282 = vmatpush.msra.mxu0 %v204
    %283 = vmatpush.msra.mxu0 %v200
    %284 = vmatpush.msra.mxu0 %v196
    %285 = vmatpush.msra.mxu0 %v192
    %286 = vmatpush.msra.mxu0 %v188
    %287 = vmatpush.msra.mxu0 %v184
    %288 = vmatpush.msra.mxu0 %v180
    %289 = vmatpush.msra.mxu0 %v176
    %290 = vmatpush.msra.mxu0 %v172
    %291 = vmatpush.msra.mxu0 %v168
    %292 = vmatpush.msra.mxu0 %v164
    %293 = vmatpush.msra.mxu0 %v160
    %294 = vmatpush.msra.mxu0 %v156
    %295 = vmatpush.msra.mxu0 %v152
    %296 = vmatpush.msra.mxu0 %v148
    %297 = vmatmul.f32.gmra.mxu0 %v82
    %v298 = vpop.f32.mrf.mxu0
    %v299 = vadd.f32 %v279, %v298
    %300 = vdwg.mxu0
    %301 = vmatpush.msra.mxu0 %v145
    %302 = vmatpush.msra.mxu0 %v141
    %303 = vmatpush.msra.mxu0 %v137
    %304 = vmatpush.msra.mxu0 %v133
    %305 = vmatpush.msra.mxu0 %v129
    %306 = vmatpush.msra.mxu0 %v125
    %307 = vmatpush.msra.mxu0 %v121
    %308 = vmatpush.msra.mxu0 %v117
    %309 = vmatpush.msra.mxu0 %v113
    %310 = vmatpush.msra.mxu0 %v109
    %311 = vmatpush.msra.mxu0 %v105
    %312 = vmatpush.msra.mxu0 %v101
    %313 = vmatpush.msra.mxu0 %v97
    %314 = vmatpush.msra.mxu0 %v93
    %315 = vmatpush.msra.mxu0 %v89
    %316 = vmatpush.msra.mxu0 %v85
    %317 = vmatmul.f32.gmra.mxu0 %v81
    %v318 = vpop.f32.mrf.mxu0
    %v319 = vadd.f32 %v215, %v318
    %320 = vdwg.mxu0
    %321 = vmatpush.msra.mxu0 %v209
    %322 = vmatpush.msra.mxu0 %v205
    %323 = vmatpush.msra.mxu0 %v201
    %324 = vmatpush.msra.mxu0 %v197
    %325 = vmatpush.msra.mxu0 %v193
    %326 = vmatpush.msra.mxu0 %v189
    %327 = vmatpush.msra.mxu0 %v185
    %328 = vmatpush.msra.mxu0 %v181
    %329 = vmatpush.msra.mxu0 %v177
    %330 = vmatpush.msra.mxu0 %v173
    %331 = vmatpush.msra.mxu0 %v169
    %332 = vmatpush.msra.mxu0 %v165
    %333 = vmatpush.msra.mxu0 %v161
    %334 = vmatpush.msra.mxu0 %v157
    %335 = vmatpush.msra.mxu0 %v153
    %336 = vmatpush.msra.mxu0 %v149
    %337 = vmatmul.f32.gmra.mxu0 %v82
    %v338 = vpop.f32.mrf.mxu0
    %v339 = vadd.f32 %v319, %v338
    %340 = vdwg.mxu0
    %341 = vmatpush.msra.mxu0 %v146
    %342 = vmatpush.msra.mxu0 %v142
    %343 = vmatpush.msra.mxu0 %v138
    %344 = vmatpush.msra.mxu0 %v134
    %345 = vmatpush.msra.mxu0 %v130
    %346 = vmatpush.msra.mxu0 %v126
    %347 = vmatpush.msra.mxu0 %v122
    %348 = vmatpush.msra.mxu0 %v118
    %349 = vmatpush.msra.mxu0 %v114
    %350 = vmatpush.msra.mxu0 %v110
    %351 = vmatpush.msra.mxu0 %v106
    %352 = vmatpush.msra.mxu0 %v102
    %353 = vmatpush.msra.mxu0 %v98
    %354 = vmatpush.msra.mxu0 %v94
    %355 = vmatpush.msra.mxu0 %v90
    %356 = vmatpush.msra.mxu0 %v86
    %357 = vmatmul.f32.gmra.mxu0 %v81
    %v358 = vpop.f32.mrf.mxu0
    %v359 = vadd.f32 %v216, %v358
    %360 = vdwg.mxu0
    %361 = vmatpush.msra.mxu0 %v210
    %362 = vmatpush.msra.mxu0 %v206
    %363 = vmatpush.msra.mxu0 %v202
    %364 = vmatpush.msra.mxu0 %v198
    %365 = vmatpush.msra.mxu0 %v194
    %366 = vmatpush.msra.mxu0 %v190
    %367 = vmatpush.msra.mxu0 %v186
    %368 = vmatpush.msra.mxu0 %v182
    %369 = vmatpush.msra.mxu0 %v178
    %370 = vmatpush.msra.mxu0 %v174
    %371 = vmatpush.msra.mxu0 %v170
    %372 = vmatpush.msra.mxu0 %v166
    %373 = vmatpush.msra.mxu0 %v162
    %374 = vmatpush.msra.mxu0 %v158
    %375 = vmatpush.msra.mxu0 %v154
    %376 = vmatpush.msra.mxu0 %v150
    %377 = vmatmul.f32.gmra.mxu0 %v82
    %v378 = vpop.f32.mrf.mxu0
    %v379 = vadd.f32 %v359, %v378
    %380 = vdwg.mxu0
    %v381 = vxor.u32 %v259, 2147483648
    %v382 = vmul.f32 %v381, 1.442695
    %v383 = vpow.pop %v382
    %v384 = vadd.f32 %v383, 1.0
    %v385 = vrcp.pop %v384
    %v386 = vmul.f32 %v384, %v385
    %v387 = vsub.f32 1.0, %v386
    %v388 = vmul.f32 %v385, %v387
    %v389 = vadd.f32 %v385, %v388
    %vm390 = vweird.f32 %v384
    %vm391 = vweird.f32 %v385
    %vm392 = vmor %vm390, %vm391
    %v393 = vsel %vm392, %v385, %v389
    %v394 = vand.u32 2147483647, %v384
    %vm395 = vcmp.eq.f32.partialorder %v394, 8.507059e+37
    %v396 = vand.u32 %v384, 2147483648
    %v397 = vor.u32 1.1754944e-38, %v396
    %v398 = vsel %vm395, %v397, %v393
    %v399 = vmul.f32 1.0, %v398
    %v400 = vxor.u32 %v299, 2147483648
    %v401 = vmul.f32 %v400, 1.442695
    %v402 = vpow.pop %v401
    %v403 = vadd.f32 %v402, 1.0
    %v404 = vrcp.pop %v403
    %v405 = vmul.f32 %v403, %v404
    %v406 = vsub.f32 1.0, %v405
    %v407 = vmul.f32 %v404, %v406
    %v408 = vadd.f32 %v404, %v407
    %vm409 = vweird.f32 %v403
    %vm410 = vweird.f32 %v404
    %vm411 = vmor %vm409, %vm410
    %v412 = vsel %vm411, %v404, %v408
    %v413 = vand.u32 2147483647, %v403
    %vm414 = vcmp.eq.f32.partialorder %v413, 8.507059e+37
    %v415 = vand.u32 %v403, 2147483648
    %v416 = vor.u32 1.1754944e-38, %v415
    %v417 = vsel %vm414, %v416, %v412
    %v418 = vmul.f32 1.0, %v417
    %v419 = vmul.f32 %v399, %v379
    %v420 = vadd.f32 %v339, %v419
    %v421 = vtanh.pop %v420
    %v422 = vsub.f32 %v82, %v421
    %v423 = vmul.f32 %v418, %v422
    %v424 = vadd.f32 %v421, %v423
    %425 = vst [vmem:[#allocation2] sm:$0xff] %v424
    %426 = vst [vmem:[#allocation11] sm:$0xff] %v424
    // Predicated region
    $region38: #{tpu_custom_call.1} parent=1 // pred_check
      _
    $region39: #{tpu_custom_call.1} parent=1 // pred_check_branch
      %428 = sbr.rel (0) target = $region41
    $region40: #{tpu_custom_call.1} parent=1 // pred_region
      %430 = vsyncadd [#allocation5], 0
      %s432 = sshll.u32 [#allocation11], 4
      %s433 = int_to_ptr.vmem [resolvable:$true] %s432
      %s434 = sshll.u32 %s4, 4
      %s435 = int_to_ptr.hbm [resolvable:$true] %s434
      %437 = dma.vmem_to_hbm [thread:$0]  %s433, 128, %s435, [#allocation5]
    $region41: #{tpu_custom_call.1} parent=1 // pred_fallthru
      _
    // Predicated region
    $region42: #{tpu_custom_call.1} parent=1 // pred_check
      _
    $region43: #{tpu_custom_call.1} parent=1 // pred_check_branch
      %439 = sbr.rel (0) target = $region45
    $region44: #{tpu_custom_call.1} parent=1 // pred_region
      %441 = dma.done [#allocation5], 128
    $region45: #{tpu_custom_call.1} parent=1 // pred_fallthru
      _
    %442 = vsyncpa [#allocation4], 1
    %443 = vsyncpa [#allocation7], 1
    %444 = vsyncpa [#allocation10], 1
    %445 = vsyncpa [#allocation5], 1

</llo_original>
